<compile_context>
chip_gen: v7x
topology: tpu7x:2x2x1
jax: 0.10.0
libtpu: 0.0.40
codegen_flags: <defaults>
</compile_context>

<pallas_src>
import functools

import jax
import jax.numpy as jnp
from jax.experimental import pallas as pl
from jax.experimental.pallas import tpu as pltpu

QUANT_BITS = 8   # bits of the uniform fake-quantizer

# Tile caps.  Must be multiples of 8 (sublanes) / 128 (lanes); keep them
# multiples of 16 on the batch axis because x is fed to the kernel as bf16.
_TB_MAX = 256    # batch-tile cap
_TN_MAX = 512    # hidden-tile cap
_VMEM_LIMIT = 48 * 1024 * 1024   # cap only; > v5e 16MiB default, < v7x 64MiB


def _quantize(x, lo, hi, bits=QUANT_BITS, clip=True):
    """Uniform fake-quantization: clamp to [lo, hi], snap to 2**bits levels."""
    levels = (1 << bits) - 1
    scale = (hi - lo) / levels
    if clip:
        x = jnp.clip(x, lo, hi)
    q = jnp.round((x - lo) / scale)
    return q * scale + lo


def _pick_tile(dim, cap):
    """Full dim if it fits (always a legal block), else the aligned cap."""
    return dim if dim <= cap else cap


# ----------------------------------------------------------------------------
# Single-step kernel (matches the PyTorch forward exactly: one cell step).
# ----------------------------------------------------------------------------
def _dfr_step_kernel(x_ref, mq_ref, prev_ref, out_ref):
    # x and mask arrive already quantized + cast to bf16 (hoisted to wrapper).
    vec = jnp.dot(x_ref[...], mq_ref[...], preferred_element_type=jnp.float32)
    out = jnp.clip(vec + prev_ref[...].astype(jnp.float32), -1.0, 1.0)  # Hardtanh
    # Already bounded to [-1, 1]; skip the redundant clamp inside Quantize.
    out_ref[...] = _quantize(out, -1.0, 1.0, clip=False).astype(out_ref.dtype)


@functools.partial(jax.jit, static_argnames=("tb_max", "tn_max", "out_dtype"))
def qparallel_dfr_cell(x, mask, prev_output, *, tb_max=_TB_MAX, tn_max=_TN_MAX,
                       out_dtype=None):
    batch, n_in = x.shape
    n_in_m, n_hidden = mask.shape
    assert n_in == n_in_m
    assert prev_output.shape == (batch, n_hidden)
    out_dtype = prev_output.dtype if out_dtype is None else out_dtype

    tb = _pick_tile(batch, tb_max)
    tn = _pick_tile(n_hidden, tn_max)
    ni = pl.cdiv(batch, tb)
    nj = pl.cdiv(n_hidden, tn)

    # Hoisted quantization: once in the wrapper, not per grid step.
    x_q = _quantize(x, -60.0, 60.0).astype(jnp.bfloat16)
    m_q = _quantize(mask, -0.5, 0.5).astype(jnp.bfloat16)

    # Grid ordering: hidden (j) outermost -> the mask block (the only operand
    # that can be large) is streamed from HBM exactly once while the tiny x
    # tile is re-read per hidden tile.  If there is only one hidden tile, lead
    # with batch so v7x's two TensorCores both get grid work.
    if nj >= 2 or ni == 1:
        grid = (nj, ni)
        x_map = lambda j, i: (i, 0)
        m_map = lambda j, i: (0, j)
        p_map = lambda j, i: (i, j)
    else:
        grid = (ni, nj)
        x_map = lambda i, j: (i, 0)
        m_map = lambda i, j: (0, j)
        p_map = lambda i, j: (i, j)

    return pl.pallas_call(
        _dfr_step_kernel,
        out_shape=jax.ShapeDtypeStruct((batch, n_hidden), out_dtype),
        grid=grid,
        in_specs=[
            pl.BlockSpec((tb, n_in), x_map),
            pl.BlockSpec((n_in, tn), m_map),
            pl.BlockSpec((tb, tn), p_map),
        ],
        out_specs=pl.BlockSpec((tb, tn), p_map),
        compiler_params=pltpu.CompilerParams(
            dimension_semantics=("parallel", "parallel"),
            vmem_limit_bytes=_VMEM_LIMIT,
        ),
    )(x_q, m_q, prev_output)


# ----------------------------------------------------------------------------
# Fused-sequence kernel: T recurrent steps in one pallas_call, hidden state
# resident in a VMEM scratch (implements the review's top optimization).
# ----------------------------------------------------------------------------
def _dfr_seq_kernel(x_ref, mq_ref, prev0_ref, out_ref, state_ref):
    t = pl.program_id(2)

    @pl.when(t == 0)
    def _():
        # Initial hidden state: read from HBM once per (batch, hidden) tile.
        state_ref[...] = prev0_ref[...].astype(jnp.float32)

    vec = jnp.dot(x_ref[...], mq_ref[...], preferred_element_type=jnp.float32)
    out = jnp.clip(vec + state_ref[...], -1.0, 1.0)          # Hardtanh(-1, 1)
    out_q = _quantize(out, -1.0, 1.0, clip=False)
    state_ref[...] = out_q                                    # stays in VMEM
    out_ref[...] = out_q.astype(out_ref.dtype)


@functools.partial(jax.jit, static_argnames=("tb_max", "tn_max", "out_dtype"))
def qparallel_dfr_cell_seq(xs, mask, prev0, *, tb_max=_TB_MAX, tn_max=_TN_MAX,
                           out_dtype=None):
    """Apply the cell over a whole sequence xs[t] with state kept in VMEM."""
    T, batch, n_in = xs.shape
    n_in_m, n_hidden = mask.shape
    assert n_in == n_in_m
    assert prev0.shape == (batch, n_hidden)
    out_dtype = prev0.dtype if out_dtype is None else out_dtype

    tb = _pick_tile(batch, tb_max)
    tn = _pick_tile(n_hidden, tn_max)
    ni = pl.cdiv(batch, tb)
    nj = pl.cdiv(n_hidden, tn)

    x_q = _quantize(xs, -60.0, 60.0).astype(jnp.bfloat16)
    m_q = _quantize(mask, -0.5, 0.5).astype(jnp.bfloat16)

    # Time axis last ("arbitrary", sequential recurrence).  Mask/prev0 blocks
    # depend only on (i, j), so they stay resident in VMEM across the whole
    # time sweep — no re-DMA per step.
    if nj >= 2 or ni == 1:
        grid = (nj, ni, T)
        x_map = lambda j, i, t: (t, i, 0)
        m_map = lambda j, i, t: (0, j)
        p_map = lambda j, i, t: (i, j)
        o_map = lambda j, i, t: (t, i, j)
    else:
        grid = (ni, nj, T)
        x_map = lambda i, j, t: (t, i, 0)
        m_map = lambda i, j, t: (0, j)
        p_map = lambda i, j, t: (i, j)
        o_map = lambda i, j, t: (t, i, j)

    return pl.pallas_call(
        _dfr_seq_kernel,
        out_shape=jax.ShapeDtypeStruct((T, batch, n_hidden), out_dtype),
        grid=grid,
        in_specs=[
            pl.BlockSpec((None, tb, n_in), x_map),   # leading (time) dim squeezed
            pl.BlockSpec((n_in, tn), m_map),
            pl.BlockSpec((tb, tn), p_map),
        ],
        out_specs=pl.BlockSpec((None, tb, tn), o_map),
        scratch_shapes=[pltpu.VMEM((tb, tn), jnp.float32)],
        compiler_params=pltpu.CompilerParams(
            dimension_semantics=("parallel", "parallel", "arbitrary"),
            vmem_limit_bytes=_VMEM_LIMIT,
        ),
    )(x_q, m_q, prev0)


# ----------------------------------------------------------------------------
# Self-test
# ----------------------------------------------------------------------------
def _ref_step(x, mask_q_bf16, prev):
    """Pure-JAX reference for one step (same bf16 matmul path as the kernel)."""
    x_q = _quantize(x, -60.0, 60.0).astype(jnp.bfloat16)
    vec = jnp.dot(x_q, mask_q_bf16, preferred_element_type=jnp.float32)
    out = jnp.clip(vec + prev.astype(jnp.float32), -1.0, 1.0)
    return _quantize(out, -1.0, 1.0, clip=False)


if __name__ == "__main__":
    key = jax.random.PRNGKey(0)
    k_mask, k_x, k_prev, k_seq = jax.random.split(key, 4)

    # ---- small single-step test (the PyTorch forward: one cell step) ----
    batch, n_in, n_hidden = 8, 4, 32
    mask = jax.random.uniform(k_mask, (n_in, n_hidden), jnp.float32, -0.5, 0.5)
    x = jax.random.uniform(k_x, (batch, n_in), jnp.float32, -80.0, 80.0)
    prev = jax.random.uniform(k_prev, (batch, n_hidden), jnp.float32, -1.0, 1.0)

    out = qparallel_dfr_cell(x, mask, prev)
    jax.block_until_ready(out)

    m_q = _quantize(mask, -0.5, 0.5).astype(jnp.bfloat16)
    ref = _ref_step(x, m_q, prev)
    assert out.shape == (batch, n_hidden)
    assert jnp.allclose(out, ref, atol=1e-2), "single-step mismatch vs reference"

    # ---- small fused-sequence test; small tile caps force a (2,2,T) grid ----
    T, batch2, n_hidden2 = 6, 32, 256
    mask2 = jax.random.uniform(k_mask, (n_in, n_hidden2), jnp.float32, -0.5, 0.5)
    xs = jax.random.uniform(k_seq, (T, batch2, n_in), jnp.float32, -80.0, 80.0)
    prev0 = jax.random.uniform(k_prev, (batch2, n_hidden2), jnp.float32, -1.0, 1.0)

    outs = qparallel_dfr_cell_seq(xs, mask2, prev0, tb_max=16, tn_max=128)
    jax.block_until_ready(outs)

    m_q2 = _quantize(mask2, -0.5, 0.5).astype(jnp.bfloat16)
    state = prev0
    refs = []
    for t in range(T):
        state = _ref_step(xs[t], m_q2, state)
        refs.append(state)
    refs = jnp.stack(refs)
    assert outs.shape == (T, batch2, n_hidden2)
    assert jnp.allclose(outs, refs, atol=1e-2), "sequence mismatch vs reference"

    print("KERNEL_OK")
</pallas_src>

<mosaic_0001>
module attributes {stable_mosaic.version = 11 : i64} {
  func.func @_dfr_step_kernel(%arg0: i32, %arg1: i32, %arg2: memref<8x4xbf16, #tpu.memory_space<vmem>>, %arg3: memref<4x32xbf16, #tpu.memory_space<vmem>>, %arg4: memref<8x32xf32, #tpu.memory_space<vmem>>, %arg5: memref<8x32xf32, #tpu.memory_space<vmem>>) attributes {dimension_semantics = [#tpu.dimension_semantics<parallel>, #tpu.dimension_semantics<parallel>], iteration_bounds = array<i64: 1, 1>, scalar_prefetch = 0 : i64, scratch_operands = 0 : i64, tpu.core_type = #tpu.core_type<tc>, window_params = [{transform_indices = @transform_0, window_bounds = array<i64: 8, 4>}, {transform_indices = @transform_1, window_bounds = array<i64: 4, 32>}, {transform_indices = @transform_2, window_bounds = array<i64: 8, 32>}, {transform_indices = @transform_3, window_bounds = array<i64: 8, 32>}]} {
    %c0 = arith.constant 0 : index
    %c0_0 = arith.constant 0 : index
    %0 = vector.load %arg2[%c0, %c0_0] : memref<8x4xbf16, #tpu.memory_space<vmem>>, vector<8x4xbf16>
    %c0_1 = arith.constant 0 : index
    %c0_2 = arith.constant 0 : index
    %1 = vector.load %arg3[%c0_1, %c0_2] : memref<4x32xbf16, #tpu.memory_space<vmem>>, vector<4x32xbf16>
    %cst = arith.constant dense<0.000000e+00> : vector<8x32xf32>
    %2 = tpu.matmul %0, %1, %cst {dimension_numbers = #tpu.dot_dimension_numbers<[1], [0], [0], [1], [0, 0, 1, 1], [], []>} : vector<8x4xbf16>, vector<4x32xbf16>, vector<8x32xf32> -> vector<8x32xf32>
    %c0_3 = arith.constant 0 : index
    %c0_4 = arith.constant 0 : index
    %3 = vector.load %arg4[%c0_3, %c0_4] : memref<8x32xf32, #tpu.memory_space<vmem>>, vector<8x32xf32>
    %4 = arith.addf %2, %3 : vector<8x32xf32>
    %cst_5 = arith.constant -1.000000e+00 : f32
    %cst_6 = arith.constant 1.000000e+00 : f32
    %5 = vector.broadcast %cst_5 : f32 to vector<8x32xf32>
    %6 = arith.maximumf %5, %4 : vector<8x32xf32>
    %7 = vector.broadcast %cst_6 : f32 to vector<8x32xf32>
    %8 = arith.minimumf %7, %6 : vector<8x32xf32>
    %cst_7 = arith.constant -1.000000e+00 : f32
    %9 = vector.broadcast %cst_7 : f32 to vector<8x32xf32>
    %10 = arith.subf %8, %9 : vector<8x32xf32>
    %cst_8 = arith.constant 0.00784313772 : f32
    %11 = vector.broadcast %cst_8 : f32 to vector<8x32xf32>
    %12 = arith.divf %10, %11 : vector<8x32xf32>
    %13 = math.roundeven %12 : vector<8x32xf32>
    %cst_9 = arith.constant 0.00784313772 : f32
    %14 = vector.broadcast %cst_9 : f32 to vector<8x32xf32>
    %15 = arith.mulf %13, %14 : vector<8x32xf32>
    %cst_10 = arith.constant -1.000000e+00 : f32
    %16 = vector.broadcast %cst_10 : f32 to vector<8x32xf32>
    %17 = arith.addf %15, %16 : vector<8x32xf32>
    %c0_11 = arith.constant 0 : index
    %c0_12 = arith.constant 0 : index
    %18 = vector.load %arg5[%c0_11, %c0_12] : memref<8x32xf32, #tpu.memory_space<vmem>>, vector<8x32xf32>
    tpu.vector_store %arg5[%c0_11, %c0_12], %17 {strides = array<i32>} : memref<8x32xf32, #tpu.memory_space<vmem>>, vector<8x32xf32>,
    return
  }
  func.func @transform_0(%arg0: i32, %arg1: i32) -> (i32, i32) {
    %c0_i32 = arith.constant 0 : i32
    %c0_i32_0 = arith.constant 0 : i32
    return %arg1, %c0_i32 : i32, i32
  }
  func.func @transform_1(%arg0: i32, %arg1: i32) -> (i32, i32) {
    %c0_i32 = arith.constant 0 : i32
    %c0_i32_0 = arith.constant 0 : i32
    return %c0_i32, %arg0 : i32, i32
  }
  func.func @transform_2(%arg0: i32, %arg1: i32) -> (i32, i32) {
    %c0_i32 = arith.constant 0 : i32
    return %arg1, %arg0 : i32, i32
  }
  func.func @transform_3(%arg0: i32, %arg1: i32) -> (i32, i32) {
    %c0_i32 = arith.constant 0 : i32
    return %arg1, %arg0 : i32, i32
  }
}

</mosaic_0001>

<llo_original>
// kernel: qparallel_dfr_cell.1
$region0: #{qparallel_dfr_cell.1}
  #allocation0 [shape = 'u32[]', space=smem, size = 0x4, offset = 0x4, fixed_abs, tag = 'smem constant byte address 0x4 - core index']
  #allocation1 [shape = 'u32[144,128]{1,0:T(1,128)}', space=vmem, size = 0x12000, scoped, tag = 'internal scratch']
  %s0 = inlined_call_operand.vmem [shape: bf16[8,4], index: 0, kind: input, shape index: {}]
  %s1 = inlined_call_operand.vmem [shape: bf16[4,32], index: 1, kind: input, shape index: {}]
  %s2 = inlined_call_operand.vmem [shape: f32[8,32], index: 2, kind: input, shape index: {}]
  %s3 = inlined_call_operand.hbm [shape: f32[8,32], index: 3, kind: output, shape index: {}]
  %s4 = sld [smem:[#allocation0]]
  $region22: #{qparallel_dfr_cell.1} parent=0
    _
  %s6 = ssub.s32 1, %s4
  %s7 = scalar_select 0, %s6, %s4
  $region1: #{qparallel_dfr_cell.1} parent=0
    #allocation2 [shape = 'u8[4096]{0}', space=vmem, size = 0x1000, scoped, tag = 'output window, operand 0, single buffered']
    #allocation3 [shape = 's32[1]{0}', space=sflag, size = 0x4, scoped, tag = 'scoped memory for qparallel_dfr_cell.1']
    %8 = vsyncpa [#allocation3], 0
    // Predicated region
    $region2: #{qparallel_dfr_cell.1} parent=1 // pred_check
      _
    $region3: #{qparallel_dfr_cell.1} parent=1 // pred_check_branch
      %10 = sbr.rel (0) target = $region5
    $region4: #{qparallel_dfr_cell.1} parent=1 // pred_region
      _
    $region5: #{qparallel_dfr_cell.1} parent=1 // pred_fallthru
      _
    // Predicated region
    $region6: #{qparallel_dfr_cell.1} parent=1 // pred_check
      _
    $region7: #{qparallel_dfr_cell.1} parent=1 // pred_check_branch
      %12 = sbr.rel (0) target = $region9
    $region8: #{qparallel_dfr_cell.1} parent=1 // pred_region
      _
    $region9: #{qparallel_dfr_cell.1} parent=1 // pred_fallthru
      _
    // Predicated region
    $region10: #{qparallel_dfr_cell.1} parent=1 // pred_check
      _
    $region11: #{qparallel_dfr_cell.1} parent=1 // pred_check_branch
      %14 = sbr.rel (0) target = $region13
    $region12: #{qparallel_dfr_cell.1} parent=1 // pred_region
      _
    $region13: #{qparallel_dfr_cell.1} parent=1 // pred_fallthru
      _
    %v16 = vld [vmem:[%s0] sm:$0xf]
    %v17 = vld [vmem:[%s1] sm:$0x3]
    %v18 = vld [vmem:[%s2] sm:$0xff]
    %vm19 = vcmask 31744
    %v21 = vsel %vm19, %v16, 0
    %vm23 = vcmask 1041408
    %v25 = vsel %vm23, %v17, 0
    %27 = vmatprep.subr.bf16.mxu0 0
    %28 = vmatpush1.bf16.msra.mxu0 %v25
    %29 = vmatprep.subr.bf16.mxu0 0
    %30 = vmatpush1.bf16.msra.mxu0 0
    %31 = vmatprep.subr.bf16.mxu0 0
    %32 = vmatpush1.bf16.msra.mxu0 0
    %33 = vmatprep.subr.bf16.mxu0 0
    %34 = vmatpush1.bf16.msra.mxu0 0
    %35 = vmatprep.subr.bf16.mxu0 0
    %36 = vmatpush1.bf16.msra.mxu0 0
    %37 = vmatprep.subr.bf16.mxu0 0
    %38 = vmatpush1.bf16.msra.mxu0 0
    %39 = vmatprep.subr.bf16.mxu0 0
    %40 = vmatpush1.bf16.msra.mxu0 0
    %41 = vmatprep.subr.bf16.mxu0 0
    %42 = vmatpush1.bf16.msra.mxu0 0
    %43 = vmatprep.subr.bf16.mxu0 0
    %44 = vmatpush1.bf16.msra.mxu0 0
    %45 = vmatprep.subr.bf16.mxu0 0
    %46 = vmatpush1.bf16.msra.mxu0 0
    %47 = vmatprep.subr.bf16.mxu0 0
    %48 = vmatpush1.bf16.msra.mxu0 0
    %49 = vmatprep.subr.bf16.mxu0 0
    %50 = vmatpush1.bf16.msra.mxu0 0
    %51 = vmatprep.subr.bf16.mxu0 0
    %52 = vmatpush1.bf16.msra.mxu0 0
    %53 = vmatprep.subr.bf16.mxu0 0
    %54 = vmatpush1.bf16.msra.mxu0 0
    %55 = vmatprep.subr.bf16.mxu0 0
    %56 = vmatpush1.bf16.msra.mxu0 0
    %57 = vmatprep.subr.bf16.mxu0 0
    %58 = vmatpush1.bf16.msra.mxu0 0
    %59 = vmatprep.mubr.bf16.mxu0 0
    %60 = vmatmul.mubr.bf16.gmra.mrb[0].mxu0 %v21
    %v61 = vpop.f32.mrb[0].mxu0
    %v62 = vadd.f32 %v18, %v61
    %v63 = vpop.f32.mrb[0].mxu0
    %v64 = vpop.f32.mrb[0].mxu0
    %v65 = vpop.f32.mrb[0].mxu0
    %66 = vdwg.mxu0
    %v67 = vmax.f32 %v62, -1.0
    %v68 = vmin.f32 %v67, 1.0
    %v69 = vsub.f32 %v68, -1.0
    %v70 = vrcp.pop 0.007843138
    %v71 = vmul.f32 %v69, %v70
    %v72 = vround.ne.pseudo %v71
    %v73 = vmul.f32 %v72, 0.007843138
    %v74 = vadd.f32 %v73, -1.0
    %vm75 = vcmask 261120
    %76 = vst.msk [vmem:[#allocation2] sm:$0xff] %vm75, %v74
    // Predicated region
    $region14: #{qparallel_dfr_cell.1} parent=1 // pred_check
      _
    $region15: #{qparallel_dfr_cell.1} parent=1 // pred_check_branch
      %78 = sbr.rel (0) target = $region17
    $region16: #{qparallel_dfr_cell.1} parent=1 // pred_region
      %s80 = ssub.s32 128, 128
      %81 = vsyncadd [#allocation3], %s80
      %s83 = sshll.u32 [#allocation2], 4
      %s84 = int_to_ptr.vmem [resolvable:$true] %s83
      %86 = dma.vmem_to_hbm [thread:$0]  %s84, 128, %s3, [#allocation3]
    $region17: #{qparallel_dfr_cell.1} parent=1 // pred_fallthru
      _
    // Predicated region
    $region18: #{qparallel_dfr_cell.1} parent=1 // pred_check
      _
    $region19: #{qparallel_dfr_cell.1} parent=1 // pred_check_branch
      %88 = sbr.rel (0) target = $region21
    $region20: #{qparallel_dfr_cell.1} parent=1 // pred_region
      %89 = dma.done [#allocation3], 128
    $region21: #{qparallel_dfr_cell.1} parent=1 // pred_fallthru
      _
    %90 = vsyncpa [#allocation3], 1

</llo_original>
